<compile_context>
chip_gen: v7x
topology: tpu7x:2x2x1
jax: 0.10.0
libtpu: 0.0.40
codegen_flags: <defaults>
</compile_context>

<pallas_src>
import math

import jax
import jax.numpy as jnp
from jax.experimental import pallas as pl
from jax.experimental.pallas import tpu as pltpu


def reward_head_kernel(x_ref,       # VMEM [B, H]  bf16  (resident across H2 tiles)
                       w1_ref,      # VMEM [H, tn] bf16  (streamed tile of first-layer weight)
                       b1_ref,      # VMEM [1, tn] f32
                       w2t_ref,     # VMEM [1, tn] f32   (tile of transposed second-layer weight)
                       b2_ref,      # VMEM [1, 1]  f32
                       out_ref):    # VMEM [B, 1]  f32   (resident accumulator across the grid)
    j = pl.program_id(0)

    @pl.when(j == 0)
    def _():
        out_ref[...] = jnp.zeros_like(out_ref)

    # First Linear on the MXU for this H2 tile: [B, H] x [H, tn] -> [B, tn] (f32 acc).
    h1 = jnp.dot(x_ref[...], w1_ref[...], preferred_element_type=jnp.float32)
    h1 = jnp.maximum(h1 + b1_ref[...], 0.0)          # ReLU; Dropout(0.1) is identity in eval

    # Second Linear (N=1): VPU multiply + lane reduce per tile, accumulated into the
    # resident output block (rides the XLU slot, hidden under the next weight-tile DMA).
    out_ref[...] += jnp.sum(h1 * w2t_ref[...], axis=-1, keepdims=True)   # [B, 1] partial

    @pl.when(j == pl.num_programs(0) - 1)
    def _():
        out_ref[...] += b2_ref[...]


def _pick_h2_tile(h2, target=512):
    """Largest lane tile <= target that divides H2 (multiple of 128, or full H2)."""
    if h2 <= target:
        return h2
    start = target - (target % 128)
    for tn in range(start, 0, -128):
        if h2 % tn == 0:
            return tn
    return h2


def reward_forward(last_hidden_state, attention_mask, w1, b1, w2, b2,
                   *, compute_dtype=jnp.bfloat16):
    """Pallas wrapper. Returns rewards of shape [B] (float32)."""
    B, S, H = last_hidden_state.shape
    H2 = w1.shape[1]
    tn = _pick_h2_tile(H2)
    n_tiles = H2 // tn

    # last valid position per row, clamped at 0 (all-padding rows gather position 0)
    last_pos = jnp.maximum(
        jnp.sum(attention_mask.astype(jnp.int32), axis=1) - 1, 0).astype(jnp.int32)

    # Gather the last-token embeddings in the wrapper (XLA gather: only B*H elements
    # of hidden are read from HBM), and round to bf16 once.
    x = jnp.take_along_axis(last_hidden_state, last_pos[:, None, None], axis=1)[:, 0, :]
    x = x.astype(compute_dtype)                                    # [B, H] bf16

    w1c = w1.astype(compute_dtype)                                 # [H, H2] bf16 MXU operand
    b1c = b1.reshape(1, H2).astype(jnp.float32)
    w2t = w2.reshape(1, H2).astype(jnp.float32)                    # transposed second-layer weight
    b2c = b2.reshape(1, 1).astype(jnp.float32)

    # VMEM budget: double-buffered w1 tile dominates; x / biases / output are small.
    vmem_limit = int(2 * H * tn * 2            # w1 tile, double-buffered, bf16
                     + 2 * B * H * 2           # x (resident, double-buffered bookkeeping)
                     + 2 * 2 * tn * 4          # b1 + w2t tiles
                     + 2 * B * 4               # output block
                     ) + (4 << 20)             # headroom for compiler scratch
    vmem_limit = min(vmem_limit, 100 << 20)

    cost = pl.CostEstimate(
        flops=2 * B * H * H2 + 3 * B * H2,
        transcendentals=0,
        bytes_accessed=H * H2 * 2 + B * H * 2 + 2 * H2 * 4 + B * 4)

    out = pl.pallas_call(
        reward_head_kernel,
        out_shape=jax.ShapeDtypeStruct((B, 1), jnp.float32),
        grid=(n_tiles,),
        in_specs=[
            pl.BlockSpec((B, H), lambda j: (0, 0)),     # x: constant block, DMA'd once
            pl.BlockSpec((H, tn), lambda j: (0, j)),    # w1: streamed/pipelined along H2
            pl.BlockSpec((1, tn), lambda j: (0, j)),    # b1 tile
            pl.BlockSpec((1, tn), lambda j: (0, j)),    # w2^T tile
            pl.BlockSpec((1, 1), lambda j: (0, 0)),     # b2
        ],
        # Output block index is constant across the (reduction) grid axis -> resident
        # accumulator, written back to HBM once.  Axis must therefore be "arbitrary".
        out_specs=pl.BlockSpec((B, 1), lambda j: (0, 0)),
        compiler_params=pltpu.CompilerParams(
            dimension_semantics=("arbitrary",),
            vmem_limit_bytes=vmem_limit),
        cost_estimate=cost,
    )(x, w1c, b1c, w2t, b2c)
    return out[:, 0]   # [B], equivalent to .squeeze(-1) of the PyTorch [B, 1] output


def init_reward_head(key, hidden_size):
    """Deterministic Xavier-uniform(gain=0.1) init, zero biases — mirrors PyTorch __init__."""
    h2 = hidden_size // 2
    k1, k2 = jax.random.split(key)

    def xavier(k, fan_in, fan_out):
        limit = 0.1 * math.sqrt(6.0 / (fan_in + fan_out))
        return jax.random.uniform(k, (fan_in, fan_out), jnp.float32,
                                  minval=-limit, maxval=limit)

    w1 = xavier(k1, hidden_size, h2)          # [H, H/2]
    b1 = jnp.zeros((1, h2), jnp.float32)
    w2 = xavier(k2, h2, 1)                    # [H/2, 1]
    b2 = jnp.zeros((1, 1), jnp.float32)
    return w1, b1, w2, b2


def reward_forward_ref(last_hidden_state, attention_mask, w1, b1, w2, b2,
                       compute_dtype=jnp.bfloat16):
    """Pure-JAX reference, applying the same bf16 operand rounding as the kernel."""
    B = last_hidden_state.shape[0]
    last_pos = jnp.maximum(jnp.sum(attention_mask, axis=1) - 1, 0)
    last_tok = last_hidden_state[jnp.arange(B), last_pos]
    last_tok = last_tok.astype(compute_dtype).astype(jnp.float32)
    w1c = w1.astype(compute_dtype).astype(jnp.float32)
    h1 = jnp.maximum(last_tok @ w1c + b1.reshape(1, -1), 0.0)
    return (h1 @ w2 + b2.reshape(1, 1))[:, 0]


if __name__ == "__main__":
    B, S, H = 2, 8, 32  # small shapes: batch=2, seq=8, hidden=32

    key = jax.random.PRNGKey(0)
    k_hidden, k_params = jax.random.split(key)

    # "base_model" last hidden state (synthetic, deterministic)
    last_hidden_state = jax.random.normal(k_hidden, (B, S, H), jnp.float32)

    # attention mask with variable lengths (lengths 8 and 5)
    lengths = jnp.array([8, 5], jnp.int32)
    attention_mask = (
        jax.lax.broadcasted_iota(jnp.int32, (B, S), 1) < lengths[:, None]
    ).astype(jnp.int32)

    w1, b1, w2, b2 = init_reward_head(k_params, H)

    rewards = reward_forward(last_hidden_state, attention_mask, w1, b1, w2, b2)
    jax.block_until_ready(rewards)

    ref = reward_forward_ref(last_hidden_state, attention_mask, w1, b1, w2, b2)
    assert rewards.shape == (B,)
    assert jnp.allclose(rewards, ref, atol=1e-4, rtol=1e-4), (rewards, ref)

    print("KERNEL_OK")
</pallas_src>

<mosaic_0001>
module attributes {stable_mosaic.version = 11 : i64} {
  func.func @reward_head_kernel(%arg0: i32, %arg1: memref<2x32xbf16, #tpu.memory_space<vmem>>, %arg2: memref<32x16xbf16, #tpu.memory_space<vmem>>, %arg3: memref<1x16xf32, #tpu.memory_space<vmem>>, %arg4: memref<1x16xf32, #tpu.memory_space<vmem>>, %arg5: memref<1x1xf32, #tpu.memory_space<vmem>>, %arg6: memref<2x1xf32, #tpu.memory_space<vmem>>) attributes {dimension_semantics = [#tpu.dimension_semantics<arbitrary>], iteration_bounds = array<i64: 1>, scalar_prefetch = 0 : i64, scratch_operands = 0 : i64, tpu.core_type = #tpu.core_type<tc>, window_params = [{pipeline_mode = #tpu.pipeline_mode<synchronous>, transform_indices = @transform_0, window_bounds = array<i64: 2, 32>}, {transform_indices = @transform_1, window_bounds = array<i64: 32, 16>}, {transform_indices = @transform_2, window_bounds = array<i64: 1, 16>}, {transform_indices = @transform_3, window_bounds = array<i64: 1, 16>}, {pipeline_mode = #tpu.pipeline_mode<synchronous>, transform_indices = @transform_4, window_bounds = array<i64: 1, 1>}, {pipeline_mode = #tpu.pipeline_mode<synchronous>, transform_indices = @transform_5, window_bounds = array<i64: 2, 1>}]} {
    %c0_i32 = arith.constant 0 : i32
    %0 = arith.cmpi eq, %arg0, %c0_i32 : i32
    %1 = arith.extui %0 : i1 to i32
    %c0_i32_0 = arith.constant 0 : i32
    %2 = arith.cmpi ne, %1, %c0_i32_0 : i32
    scf.if %2 {
      %cst_16 = arith.constant 0.000000e+00 : f32
      %22 = vector.broadcast %cst_16 : f32 to vector<2x1xf32>
      %c0_17 = arith.constant 0 : index
      %c0_18 = arith.constant 0 : index
      %23 = vector.load %arg6[%c0_17, %c0_18] : memref<2x1xf32, #tpu.memory_space<vmem>>, vector<2x1xf32>
      tpu.vector_store %arg6[%c0_17, %c0_18], %22 {strides = array<i32>} : memref<2x1xf32, #tpu.memory_space<vmem>>, vector<2x1xf32>,
    } else {
    }
    %c0 = arith.constant 0 : index
    %c0_1 = arith.constant 0 : index
    %3 = vector.load %arg1[%c0, %c0_1] : memref<2x32xbf16, #tpu.memory_space<vmem>>, vector<2x32xbf16>
    %c0_2 = arith.constant 0 : index
    %c0_3 = arith.constant 0 : index
    %4 = vector.load %arg2[%c0_2, %c0_3] : memref<32x16xbf16, #tpu.memory_space<vmem>>, vector<32x16xbf16>
    %cst = arith.constant dense<0.000000e+00> : vector<2x16xf32>
    %5 = tpu.matmul %3, %4, %cst {dimension_numbers = #tpu.dot_dimension_numbers<[1], [0], [0], [1], [0, 0, 1, 1], [], []>} : vector<2x32xbf16>, vector<32x16xbf16>, vector<2x16xf32> -> vector<2x16xf32>
    %c0_4 = arith.constant 0 : index
    %c0_5 = arith.constant 0 : index
    %6 = vector.load %arg3[%c0_4, %c0_5] : memref<1x16xf32, #tpu.memory_space<vmem>>, vector<1x16xf32>
    %7 = vector.broadcast %6 : vector<1x16xf32> to vector<2x16xf32>
    %8 = arith.addf %5, %7 : vector<2x16xf32>
    %cst_6 = arith.constant 0.000000e+00 : f32
    %9 = vector.broadcast %cst_6 : f32 to vector<2x16xf32>
    %10 = arith.maximumf %8, %9 : vector<2x16xf32>
    %c0_7 = arith.constant 0 : index
    %c0_8 = arith.constant 0 : index
    %11 = vector.load %arg6[%c0_7, %c0_8] : memref<2x1xf32, #tpu.memory_space<vmem>>, vector<2x1xf32>
    %c0_9 = arith.constant 0 : index
    %c0_10 = arith.constant 0 : index
    %12 = vector.load %arg4[%c0_9, %c0_10] : memref<1x16xf32, #tpu.memory_space<vmem>>, vector<1x16xf32>
    %13 = vector.broadcast %12 : vector<1x16xf32> to vector<2x16xf32>
    %14 = arith.mulf %10, %13 : vector<2x16xf32>
    %cst_11 = arith.constant dense<0.000000e+00> : vector<2xf32>
    %15 = vector.multi_reduction <add>, %14, %cst_11 [1] : vector<2x16xf32> to vector<2xf32>
    %16 = vector.shape_cast %15 : vector<2xf32> to vector<2x1xf32>
    %17 = arith.addf %11, %16 : vector<2x1xf32>
    %c0_12 = arith.constant 0 : index
    %c0_13 = arith.constant 0 : index
    %18 = vector.load %arg6[%c0_12, %c0_13] : memref<2x1xf32, #tpu.memory_space<vmem>>, vector<2x1xf32>
    tpu.vector_store %arg6[%c0_12, %c0_13], %17 {strides = array<i32>} : memref<2x1xf32, #tpu.memory_space<vmem>>, vector<2x1xf32>,
    %c0_i32_14 = arith.constant 0 : i32
    %19 = arith.cmpi eq, %arg0, %c0_i32_14 : i32
    %20 = arith.extui %19 : i1 to i32
    %c0_i32_15 = arith.constant 0 : i32
    %21 = arith.cmpi ne, %20, %c0_i32_15 : i32
    scf.if %21 {
      %c0_16 = arith.constant 0 : index
      %c0_17 = arith.constant 0 : index
      %22 = vector.load %arg6[%c0_16, %c0_17] : memref<2x1xf32, #tpu.memory_space<vmem>>, vector<2x1xf32>
      %c0_18 = arith.constant 0 : index
      %c0_19 = arith.constant 0 : index
      %23 = vector.load %arg5[%c0_18, %c0_19] : memref<1x1xf32, #tpu.memory_space<vmem>>, vector<1x1xf32>
      %24 = vector.broadcast %23 : vector<1x1xf32> to vector<2x1xf32>
      %25 = arith.addf %22, %24 : vector<2x1xf32>
      %c0_20 = arith.constant 0 : index
      %c0_21 = arith.constant 0 : index
      %26 = vector.load %arg6[%c0_20, %c0_21] : memref<2x1xf32, #tpu.memory_space<vmem>>, vector<2x1xf32>
      tpu.vector_store %arg6[%c0_20, %c0_21], %25 {strides = array<i32>} : memref<2x1xf32, #tpu.memory_space<vmem>>, vector<2x1xf32>,
    } else {
    }
    return
  }
  func.func @transform_0(%arg0: i32) -> (i32, i32) {
    %c0_i32 = arith.constant 0 : i32
    %c0_i32_0 = arith.constant 0 : i32
    %c0_i32_1 = arith.constant 0 : i32
    return %c0_i32, %c0_i32_0 : i32, i32
  }
  func.func @transform_1(%arg0: i32) -> (i32, i32) {
    %c0_i32 = arith.constant 0 : i32
    %c0_i32_0 = arith.constant 0 : i32
    return %c0_i32, %arg0 : i32, i32
  }
  func.func @transform_2(%arg0: i32) -> (i32, i32) {
    %c0_i32 = arith.constant 0 : i32
    %c0_i32_0 = arith.constant 0 : i32
    return %c0_i32, %arg0 : i32, i32
  }
  func.func @transform_3(%arg0: i32) -> (i32, i32) {
    %c0_i32 = arith.constant 0 : i32
    %c0_i32_0 = arith.constant 0 : i32
    return %c0_i32, %arg0 : i32, i32
  }
  func.func @transform_4(%arg0: i32) -> (i32, i32) {
    %c0_i32 = arith.constant 0 : i32
    %c0_i32_0 = arith.constant 0 : i32
    %c0_i32_1 = arith.constant 0 : i32
    return %c0_i32, %c0_i32_0 : i32, i32
  }
  func.func @transform_5(%arg0: i32) -> (i32, i32) {
    %c0_i32 = arith.constant 0 : i32
    %c0_i32_0 = arith.constant 0 : i32
    %c0_i32_1 = arith.constant 0 : i32
    return %c0_i32, %c0_i32_0 : i32, i32
  }
}

</mosaic_0001>

<llo_original>
// kernel: tpu_custom_call.1
$region0: #{tpu_custom_call.1}
  #allocation0 [shape = 'u32[]', space=smem, size = 0x4, offset = 0x4, fixed_abs, tag = 'smem constant byte address 0x4 - core index']
  #allocation1 [shape = 'u32[144,128]{1,0:T(1,128)}', space=vmem, size = 0x12000, scoped, tag = 'internal scratch']
  #allocation2 [shape = 'f32[1,1]{1,0:T(1,128)S(1)}', space=vmem, size = 0x200, scoped, tag = 'scoped memory for tpu_custom_call.1']
  %s0 = inlined_call_operand.vmem [shape: bf16[2,32], index: 0, kind: input, shape index: {}]
  %s1 = inlined_call_operand.vmem [shape: bf16[32,16], index: 1, kind: input, shape index: {}]
  %s2 = inlined_call_operand.vmem [shape: f32[1,16], index: 2, kind: input, shape index: {}]
  %s3 = inlined_call_operand.vmem [shape: f32[1,16], index: 3, kind: input, shape index: {}]
  %s4 = inlined_call_operand.<no memory space> [shape: f32[1,1], index: 4, kind: input, shape index: {}]
  %s5 = inlined_call_operand.vmem [shape: f32[2,1], index: 5, kind: output, shape index: {}]
  %s6 = sld [smem:[#allocation0]]
  $region38: #{tpu_custom_call.1} parent=0
    _
  %s8 = ssub.s32 1, %s6
  %s9 = scalar_select 0, %s8, %s6
  %v10 = vstv %s4
  %11 = vst [vmem:[#allocation2] sm:$0x1] %v10
  // Predicated region
  $region2: #{tpu_custom_call.1} parent=0 // pred_check
    _
  $region3: #{tpu_custom_call.1} parent=0 // pred_check_branch
    %13 = sbr.rel (0) target = $region5
  $region4: #{tpu_custom_call.1} parent=0 // pred_region
    _
  $region5: #{tpu_custom_call.1} parent=0 // pred_fallthru
    _
  // Predicated region
  $region6: #{tpu_custom_call.1} parent=0 // pred_check
    _
  $region7: #{tpu_custom_call.1} parent=0 // pred_check_branch
    %15 = sbr.rel (0) target = $region9
  $region8: #{tpu_custom_call.1} parent=0 // pred_region
    _
  $region9: #{tpu_custom_call.1} parent=0 // pred_fallthru
    _
  // Predicated region
  $region10: #{tpu_custom_call.1} parent=0 // pred_check
    _
  $region11: #{tpu_custom_call.1} parent=0 // pred_check_branch
    %17 = sbr.rel (0) target = $region13
  $region12: #{tpu_custom_call.1} parent=0 // pred_region
    _
  $region13: #{tpu_custom_call.1} parent=0 // pred_fallthru
    _
  // Predicated region
  $region14: #{tpu_custom_call.1} parent=0 // pred_check
    _
  $region15: #{tpu_custom_call.1} parent=0 // pred_check_branch
    %19 = sbr.rel (0) target = $region17
  $region16: #{tpu_custom_call.1} parent=0 // pred_region
    _
  $region17: #{tpu_custom_call.1} parent=0 // pred_fallthru
    _
  // Predicated region
  $region18: #{tpu_custom_call.1} parent=0 // pred_check
    _
  $region19: #{tpu_custom_call.1} parent=0 // pred_check_branch
    %21 = sbr.rel (0) target = $region21
  $region20: #{tpu_custom_call.1} parent=0 // pred_region
    _
  $region21: #{tpu_custom_call.1} parent=0 // pred_fallthru
    _
  %p23 = scmp.eq.s32.totalorder 0, 0
  // Predicated region
  $region22: #{tpu_custom_call.1} parent=0 // pred_check
    %p24 = pneg %p23
  $region23: #{tpu_custom_call.1} parent=0 // pred_check_branch
    %26 = sbr.rel (%p24) target = $region25
  $region24: #{tpu_custom_call.1} parent=0 // pred_region
    %vm27 = vcmask 1024
    %28 = vst.msk [vmem:[%s5] sm:$0x3] %vm27, 0.0
  $region25: #{tpu_custom_call.1} parent=0 // pred_fallthru
    _
  %v29 = vld [vmem:[%s0] sm:$0x1]
  %v30 = vld [vmem:[%s1] sm:$0xf]
  %v31 = vld [vmem:[%s1 + $0x4] sm:$0xf]
  %v32 = vld [vmem:[%s1 + $0x8] sm:$0xf]
  %v33 = vld [vmem:[%s1 + $0xc] sm:$0xf]
  %v34 = vld [vmem:[%s2] sm:$0x1]
  %v36 = vlaneseq
  %v37 = vshrl.u32 %v36, 7
  %v38 = vsub.s32 0, %v37
  %v39 = vrot.slane %v34, %v38
  %v45 = vunpack.c.l.b16 %v30
  %v46 = vunpack.c.l.b16 %v31
  %v47 = vunpack.c.l.b16 %v32
  %v48 = vunpack.c.l.b16 %v33
  %v49 = vpack.c.b16 %v46, %v45
  %v50 = vpack.c.b16 %v48, %v47
  %vm53 = vcmask 261120
  %v55 = vsel %vm53, %v29, 0
  %57 = vmatprep.subr.bf16.mxu0 0
  %58 = vmatpush1.bf16.msra.mxu0 %v49
  %59 = vmatprep.subr.bf16.mxu0 0
  %60 = vmatpush1.bf16.msra.mxu0 %v50
  %61 = vmatprep.subr.bf16.mxu0 0
  %62 = vmatpush1.bf16.msra.mxu0 0
  %63 = vmatprep.subr.bf16.mxu0 0
  %64 = vmatpush1.bf16.msra.mxu0 0
  %65 = vmatprep.subr.bf16.mxu0 0
  %66 = vmatpush1.bf16.msra.mxu0 0
  %67 = vmatprep.subr.bf16.mxu0 0
  %68 = vmatpush1.bf16.msra.mxu0 0
  %69 = vmatprep.subr.bf16.mxu0 0
  %70 = vmatpush1.bf16.msra.mxu0 0
  %71 = vmatprep.subr.bf16.mxu0 0
  %72 = vmatpush1.bf16.msra.mxu0 0
  %73 = vmatprep.subr.bf16.mxu0 0
  %74 = vmatpush1.bf16.msra.mxu0 0
  %75 = vmatprep.subr.bf16.mxu0 0
  %76 = vmatpush1.bf16.msra.mxu0 0
  %77 = vmatprep.subr.bf16.mxu0 0
  %78 = vmatpush1.bf16.msra.mxu0 0
  %79 = vmatprep.subr.bf16.mxu0 0
  %80 = vmatpush1.bf16.msra.mxu0 0
  %81 = vmatprep.subr.bf16.mxu0 0
  %82 = vmatpush1.bf16.msra.mxu0 0
  %83 = vmatprep.subr.bf16.mxu0 0
  %84 = vmatpush1.bf16.msra.mxu0 0
  %85 = vmatprep.subr.bf16.mxu0 0
  %86 = vmatpush1.bf16.msra.mxu0 0
  %87 = vmatprep.subr.bf16.mxu0 0
  %88 = vmatpush1.bf16.msra.mxu0 0
  %89 = vmatprep.mubr.bf16.mxu0 0
  %90 = vmatmul.mubr.bf16.gmra.mrb[0].mxu0 %v55
  %v91 = vpop.f32.mrb[0].mxu0
  %v92 = vadd.f32 %v39, %v91
  %v93 = vpop.f32.mrb[0].mxu0
  %v94 = vpop.f32.mrb[0].mxu0
  %v95 = vpop.f32.mrb[0].mxu0
  %96 = vdwg.mxu0
  %v97 = vmax.f32 %v92, 0.0
  %v98 = vld [vmem:[%s5] sm:$0x3]
  %v99 = vld [vmem:[%s3] sm:$0x1]
  %v101 = vlaneseq
  %v102 = vshrl.u32 %v101, 7
  %v103 = vsub.s32 0, %v102
  %v104 = vrot.slane %v99, %v103
  %v106 = vmul.f32 %v97, %v104
  %vm107 = vcmask 123904
  %v108 = vsel %vm107, %v106, 0.0
  %109 = vadd.xlane.f32.xlu0 %v108
  %v110 = vpop.xlane.xlu0 %109
  %v111 = vadd.f32 %v98, %v110
  %vm112 = vcmask 1024
  %113 = vst.msk [vmem:[%s5] sm:$0x3] %vm112, %v111
  // Predicated region
  $region26: #{tpu_custom_call.1} parent=0 // pred_check
    %p114 = pneg %p23
  $region27: #{tpu_custom_call.1} parent=0 // pred_check_branch
    %116 = sbr.rel (%p114) target = $region29
  $region28: #{tpu_custom_call.1} parent=0 // pred_region
    %v117 = vld [vmem:[%s5] sm:$0x3]
    %v118 = vld [vmem:[#allocation2] sm:$0x1]
    %v120 = vlaneseq
    %v121 = vshrl.u32 %v120, 7
    %v122 = vsub.s32 0, %v121
    %v123 = vrot.slane %v118, %v122
    %v125 = vadd.f32 %v117, %v123
    %126 = vst.msk [vmem:[%s5] sm:$0x3] %vm112, %v125
  $region29: #{tpu_custom_call.1} parent=0 // pred_fallthru
    _
  // Predicated region
  $region30: #{tpu_custom_call.1} parent=0 // pred_check
    _
  $region31: #{tpu_custom_call.1} parent=0 // pred_check_branch
    %128 = sbr.rel (0) target = $region33
  $region32: #{tpu_custom_call.1} parent=0 // pred_region
    _
  $region33: #{tpu_custom_call.1} parent=0 // pred_fallthru
    _
  // Predicated region
  $region34: #{tpu_custom_call.1} parent=0 // pred_check
    _
  $region35: #{tpu_custom_call.1} parent=0 // pred_check_branch
    %130 = sbr.rel (0) target = $region37
  $region36: #{tpu_custom_call.1} parent=0 // pred_region
    _
  $region37: #{tpu_custom_call.1} parent=0 // pred_fallthru
    _

</llo_original>
